<compile_context>
chip_gen: v5e
topology: v5e:2x2
jax: 0.10.0
libtpu: 0.0.40
codegen_flags: <defaults>
</compile_context>

<pallas_src>
import numpy as np
import jax
import jax.numpy as jnp
from jax.experimental import pallas as pl
from jax.experimental.pallas import tpu as pltpu


def _ceil_to(x, m):
    return ((x + m - 1) // m) * m


def _choose_col_tile(n_rows, npo, ab_budget_bytes=16 * 2**20):
    """Column tile (multiple of 128) so the two (n_rows, tile) f32 operator
    blocks fit the VMEM budget; capped at 1024 to bound the live output."""
    if npo <= 128:
        return npo
    max_cols = (ab_budget_bytes // (2 * 4 * n_rows)) // 128 * 128
    max_cols = max(128, max_cols)
    return int(min(npo, 1024, max_cols))


def _spec(shape, index_map, single_buffered=False):
    """BlockSpec helper; single-buffers constant / slowly-varying operands."""
    if single_buffered:
        try:
            return pl.BlockSpec(shape, index_map, pipeline_mode=pl.Buffered(1))
        except TypeError:  # fallback if this jax build lacks pipeline_mode
            pass
    return pl.BlockSpec(shape, index_map)


def _make_kernel(spectral_first):
    def kernel(x_ref, wrt_ref, wit_ref, a_ref, b_ref, o_ref):
        x = x_ref[...]                                            # (Cin, N)
        if spectral_first:                                        # Cin <= Cout
            # Spectral operators first, on the smaller channel count.
            sa = jnp.dot(x, a_ref[...], preferred_element_type=jnp.float32)
            sb = jnp.dot(x, b_ref[...], preferred_element_type=jnp.float32)
            # Channel mix; stage through o_ref so the live vreg set stays small.
            o_ref[...] = jnp.dot(wrt_ref[...], sa,
                                 preferred_element_type=jnp.float32
                                 ).astype(o_ref.dtype)
            o_ref[...] += jnp.dot(wit_ref[...], sb,
                                  preferred_element_type=jnp.float32
                                  ).astype(o_ref.dtype)
        else:                                                     # Cout < Cin
            u = jnp.dot(wrt_ref[...], x, preferred_element_type=jnp.float32)
            v = jnp.dot(wit_ref[...], x, preferred_element_type=jnp.float32)
            o_ref[...] = jnp.dot(u, a_ref[...],
                                 preferred_element_type=jnp.float32
                                 ).astype(o_ref.dtype)
            o_ref[...] += jnp.dot(v, b_ref[...],
                                  preferred_element_type=jnp.float32
                                  ).astype(o_ref.dtype)
    return kernel


def spectral_conv1d(x, weights, modes):
    """x: (B, Cin, N) float; weights: (Cin, Cout, modes) complex64."""
    B, Cin, N = x.shape
    Cout = weights.shape[1]
    assert modes <= N // 2 + 1, "modes must be <= N//2 + 1 for rfft/irfft"

    # einsum 'bix,ioj->box' sums the weight mode axis j away -> the effective
    # channel mix is frequency independent.
    w_eff = jnp.sum(weights, axis=-1)                    # (Cin, Cout) complex
    wrt = jnp.real(w_eff).T.astype(jnp.float32)          # (Cout, Cin)
    wit = jnp.imag(w_eff).T.astype(jnp.float32)          # (Cout, Cin)

    # --- Host-side (float64) DFT operators and algebraic fold ---------------
    n_idx = np.arange(N)
    m_idx = np.arange(modes)
    ang_f = 2.0 * np.pi * np.outer(n_idx, m_idx) / N     # (N, modes)
    Fr = np.cos(ang_f)
    Fi = -np.sin(ang_f)
    w_m = np.where((m_idx == 0) | ((N % 2 == 0) & (m_idx == N // 2)), 1.0, 2.0)
    ang_b = 2.0 * np.pi * np.outer(m_idx, n_idx) / N     # (modes, N)
    Gr = (w_m[:, None] / N) * np.cos(ang_b)
    Gi = -(w_m[:, None] / N) * np.sin(ang_b)
    A_op = Fr @ Gr + Fi @ Gi                             # (N, N)
    B_op = Fr @ Gi - Fi @ Gr                             # (N, N)

    # Output spatial padding: only when it buys lane-dense stores for free.
    if N < 128 or N % 128 == 0:
        npo = N
    else:
        npo = _ceil_to(N, 128)

    tnp = _choose_col_tile(N, npo)                       # output-column tile
    gc = pl.cdiv(npo, tnp)
    npo_pad = gc * tnp

    A_pad = np.zeros((N, npo_pad), np.float32)
    B_pad = np.zeros((N, npo_pad), np.float32)
    A_pad[:, :N] = A_op
    B_pad[:, :N] = B_op
    A_pad = jnp.asarray(A_pad)
    B_pad = jnp.asarray(B_pad)

    xf = x.astype(jnp.float32)
    spectral_first = Cin <= Cout
    minc = min(Cin, Cout)

    # Resident-set sized VMEM limit and cost estimate.
    est_vmem = 4 * (2 * Cin * N            # x, double buffered
                    + 2 * Cout * tnp       # out, double buffered
                    + 2 * N * tnp          # A + B, single buffered
                    + 2 * Cout * Cin)      # Wr^T + Wi^T
    vmem_limit = int(min(64 * 2**20, max(16 * 2**20, (est_vmem * 3) // 2 + (1 << 20))))

    flops = int(4 * B * (minc * N * npo_pad
                         + Cin * Cout * (npo_pad if spectral_first else N)))
    bytes_accessed = int(4 * (B * Cin * N + B * Cout * npo_pad
                              + 2 * N * npo_pad + 2 * Cin * Cout))

    out = pl.pallas_call(
        _make_kernel(spectral_first),
        out_shape=jax.ShapeDtypeStruct((B, Cout, npo_pad), jnp.float32),
        # Column tiles on the OUTER axis, batch on the fast inner axis, so the
        # single-buffered A/B blocks are reused across all batches.
        grid=(gc, B),
        in_specs=[
            _spec((None, Cin, N), lambda c, b: (b, 0, 0)),                 # x
            _spec((Cout, Cin), lambda c, b: (0, 0), single_buffered=True),  # Wr^T
            _spec((Cout, Cin), lambda c, b: (0, 0), single_buffered=True),  # Wi^T
            _spec((N, tnp), lambda c, b: (0, c), single_buffered=True),     # A
            _spec((N, tnp), lambda c, b: (0, c), single_buffered=True),     # B
        ],
        out_specs=pl.BlockSpec((None, Cout, tnp), lambda c, b: (b, 0, c)),
        compiler_params=pltpu.CompilerParams(
            dimension_semantics=("parallel", "parallel"),
            vmem_limit_bytes=vmem_limit),
        cost_estimate=pl.CostEstimate(flops=flops, transcendentals=0,
                                      bytes_accessed=bytes_accessed),
    )(xf, wrt, wit, A_pad, B_pad)

    if npo_pad != N:
        out = out[:, :, :N]
    return out


def spectral_conv1d_reference(x, weights, modes):
    """Pure-JAX replica of the PyTorch forward (for verification)."""
    B, Cin, N = x.shape
    Cout = weights.shape[1]
    x_ft = jnp.fft.rfft(x, axis=-1)
    mixed = jnp.einsum('bix,ioj->box', x_ft[:, :, :modes], weights)
    out_ft = jnp.zeros((B, Cout, N // 2 + 1), dtype=jnp.complex64)
    out_ft = out_ft.at[:, :, :modes].set(mixed)
    return jnp.fft.irfft(out_ft, n=N, axis=-1)


if __name__ == "__main__":
    B, Cin, Cout, N, modes = 2, 4, 4, 16, 5

    key = jax.random.PRNGKey(0)
    kx, kwr, kwi = jax.random.split(key, 3)

    x = jax.random.normal(kx, (B, Cin, N), dtype=jnp.float32)

    # nn.Parameter(scale * torch.rand(Cin, Cout, modes, dtype=cfloat)):
    # uniform [0,1) real & imag parts, scaled by 1/(Cin*Cout).
    scale = 1.0 / (Cin * Cout)
    w_re = scale * jax.random.uniform(kwr, (Cin, Cout, modes), dtype=jnp.float32)
    w_im = scale * jax.random.uniform(kwi, (Cin, Cout, modes), dtype=jnp.float32)
    weights = (w_re + 1j * w_im).astype(jnp.complex64)

    y = spectral_conv1d(x, weights, modes)
    y = jax.block_until_ready(y)

    y_ref = spectral_conv1d_reference(x, weights, modes)
    np.testing.assert_allclose(np.asarray(y), np.asarray(y_ref),
                               rtol=1e-4, atol=1e-5)

    print("KERNEL_OK")
</pallas_src>

<mosaic_0001>
module attributes {stable_mosaic.version = 11 : i64} {
  func.func @kernel(%arg0: i32, %arg1: i32, %arg2: memref<1x4x16xf32, #tpu.memory_space<vmem>>, %arg3: memref<4x4xf32, #tpu.memory_space<vmem>>, %arg4: memref<4x4xf32, #tpu.memory_space<vmem>>, %arg5: memref<16x16xf32, #tpu.memory_space<vmem>>, %arg6: memref<16x16xf32, #tpu.memory_space<vmem>>, %arg7: memref<1x4x16xf32, #tpu.memory_space<vmem>>) attributes {dimension_semantics = [#tpu.dimension_semantics<parallel>, #tpu.dimension_semantics<parallel>], iteration_bounds = array<i64: 1, 2>, scalar_prefetch = 0 : i64, scratch_operands = 0 : i64, tpu.core_type = #tpu.core_type<tc>, window_params = [{transform_indices = @transform_0, window_bounds = array<i64: 1, 4, 16>}, {pipeline_mode = #tpu.pipeline_mode<synchronous>, transform_indices = @transform_1, window_bounds = array<i64: 4, 4>}, {pipeline_mode = #tpu.pipeline_mode<synchronous>, transform_indices = @transform_2, window_bounds = array<i64: 4, 4>}, {pipeline_mode = #tpu.pipeline_mode<synchronous>, transform_indices = @transform_3, window_bounds = array<i64: 16, 16>}, {pipeline_mode = #tpu.pipeline_mode<synchronous>, transform_indices = @transform_4, window_bounds = array<i64: 16, 16>}, {transform_indices = @transform_5, window_bounds = array<i64: 1, 4, 16>}]} {
    %c0 = arith.constant 0 : index
    %c0_0 = arith.constant 0 : index
    %c0_1 = arith.constant 0 : index
    %0 = vector.load %arg2[%c0, %c0_0, %c0_1] : memref<1x4x16xf32, #tpu.memory_space<vmem>>, vector<1x4x16xf32>
    %1 = vector.shape_cast %0 : vector<1x4x16xf32> to vector<4x16xf32>
    %c0_2 = arith.constant 0 : index
    %c0_3 = arith.constant 0 : index
    %2 = vector.load %arg5[%c0_2, %c0_3] : memref<16x16xf32, #tpu.memory_space<vmem>>, vector<16x16xf32>
    %cst = arith.constant dense<0.000000e+00> : vector<4x16xf32>
    %3 = tpu.matmul %1, %2, %cst {dimension_numbers = #tpu.dot_dimension_numbers<[1], [0], [0], [1], [0, 0, 1, 1], [], []>} : vector<4x16xf32>, vector<16x16xf32>, vector<4x16xf32> -> vector<4x16xf32>
    %c0_4 = arith.constant 0 : index
    %c0_5 = arith.constant 0 : index
    %4 = vector.load %arg6[%c0_4, %c0_5] : memref<16x16xf32, #tpu.memory_space<vmem>>, vector<16x16xf32>
    %cst_6 = arith.constant dense<0.000000e+00> : vector<4x16xf32>
    %5 = tpu.matmul %1, %4, %cst_6 {dimension_numbers = #tpu.dot_dimension_numbers<[1], [0], [0], [1], [0, 0, 1, 1], [], []>} : vector<4x16xf32>, vector<16x16xf32>, vector<4x16xf32> -> vector<4x16xf32>
    %c0_7 = arith.constant 0 : index
    %c0_8 = arith.constant 0 : index
    %6 = vector.load %arg3[%c0_7, %c0_8] : memref<4x4xf32, #tpu.memory_space<vmem>>, vector<4x4xf32>
    %cst_9 = arith.constant dense<0.000000e+00> : vector<4x16xf32>
    %7 = tpu.matmul %6, %3, %cst_9 {dimension_numbers = #tpu.dot_dimension_numbers<[1], [0], [0], [1], [0, 0, 1, 1], [], []>} : vector<4x4xf32>, vector<4x16xf32>, vector<4x16xf32> -> vector<4x16xf32>
    %c0_10 = arith.constant 0 : index
    %c0_11 = arith.constant 0 : index
    %c0_12 = arith.constant 0 : index
    %8 = vector.load %arg7[%c0_10, %c0_11, %c0_12] : memref<1x4x16xf32, #tpu.memory_space<vmem>>, vector<1x4x16xf32>
    %9 = vector.shape_cast %8 : vector<1x4x16xf32> to vector<4x16xf32>
    %10 = vector.shape_cast %7 : vector<4x16xf32> to vector<1x4x16xf32>
    tpu.vector_store %arg7[%c0_10, %c0_11, %c0_12], %10 {strides = array<i32>} : memref<1x4x16xf32, #tpu.memory_space<vmem>>, vector<1x4x16xf32>,
    %c0_13 = arith.constant 0 : index
    %c0_14 = arith.constant 0 : index
    %c0_15 = arith.constant 0 : index
    %11 = vector.load %arg7[%c0_13, %c0_14, %c0_15] : memref<1x4x16xf32, #tpu.memory_space<vmem>>, vector<1x4x16xf32>
    %12 = vector.shape_cast %11 : vector<1x4x16xf32> to vector<4x16xf32>
    %c0_16 = arith.constant 0 : index
    %c0_17 = arith.constant 0 : index
    %13 = vector.load %arg4[%c0_16, %c0_17] : memref<4x4xf32, #tpu.memory_space<vmem>>, vector<4x4xf32>
    %cst_18 = arith.constant dense<0.000000e+00> : vector<4x16xf32>
    %14 = tpu.matmul %13, %5, %cst_18 {dimension_numbers = #tpu.dot_dimension_numbers<[1], [0], [0], [1], [0, 0, 1, 1], [], []>} : vector<4x4xf32>, vector<4x16xf32>, vector<4x16xf32> -> vector<4x16xf32>
    %15 = arith.addf %12, %14 : vector<4x16xf32>
    %c0_19 = arith.constant 0 : index
    %c0_20 = arith.constant 0 : index
    %c0_21 = arith.constant 0 : index
    %16 = vector.load %arg7[%c0_19, %c0_20, %c0_21] : memref<1x4x16xf32, #tpu.memory_space<vmem>>, vector<1x4x16xf32>
    %17 = vector.shape_cast %16 : vector<1x4x16xf32> to vector<4x16xf32>
    %18 = vector.shape_cast %15 : vector<4x16xf32> to vector<1x4x16xf32>
    tpu.vector_store %arg7[%c0_19, %c0_20, %c0_21], %18 {strides = array<i32>} : memref<1x4x16xf32, #tpu.memory_space<vmem>>, vector<1x4x16xf32>,
    return
  }
  func.func @transform_0(%arg0: i32, %arg1: i32) -> (i32, i32, i32) {
    %c0_i32 = arith.constant 0 : i32
    %c0_i32_0 = arith.constant 0 : i32
    %c0_i32_1 = arith.constant 0 : i32
    return %arg1, %c0_i32, %c0_i32_0 : i32, i32, i32
  }
  func.func @transform_1(%arg0: i32, %arg1: i32) -> (i32, i32) {
    %c0_i32 = arith.constant 0 : i32
    %c0_i32_0 = arith.constant 0 : i32
    %c0_i32_1 = arith.constant 0 : i32
    return %c0_i32, %c0_i32_0 : i32, i32
  }
  func.func @transform_2(%arg0: i32, %arg1: i32) -> (i32, i32) {
    %c0_i32 = arith.constant 0 : i32
    %c0_i32_0 = arith.constant 0 : i32
    %c0_i32_1 = arith.constant 0 : i32
    return %c0_i32, %c0_i32_0 : i32, i32
  }
  func.func @transform_3(%arg0: i32, %arg1: i32) -> (i32, i32) {
    %c0_i32 = arith.constant 0 : i32
    %c0_i32_0 = arith.constant 0 : i32
    return %c0_i32, %arg0 : i32, i32
  }
  func.func @transform_4(%arg0: i32, %arg1: i32) -> (i32, i32) {
    %c0_i32 = arith.constant 0 : i32
    %c0_i32_0 = arith.constant 0 : i32
    return %c0_i32, %arg0 : i32, i32
  }
  func.func @transform_5(%arg0: i32, %arg1: i32) -> (i32, i32, i32) {
    %c0_i32 = arith.constant 0 : i32
    %c0_i32_0 = arith.constant 0 : i32
    return %arg1, %c0_i32, %arg0 : i32, i32, i32
  }
}

</mosaic_0001>

<llo_original>
// kernel: tpu_custom_call.1
$region0: #{tpu_custom_call.1}
  #allocation0 [shape = 'u32[]', space=smem, size = 0x4, offset = 0x4, fixed_abs, tag = 'smem constant byte address 0x4 - core index']
  #allocation1 [shape = 'u32[72,128]{1,0:T(1,128)}', space=vmem, size = 0x9000, scoped, tag = 'internal scratch']
  %s0 = inlined_call_operand.hbm [shape: f32[2,4,16], index: 0, kind: input, shape index: {}]
  %s1 = inlined_call_operand.hbm [shape: f32[4,4], index: 1, kind: input, shape index: {}]
  %s2 = inlined_call_operand.hbm [shape: f32[4,4], index: 2, kind: input, shape index: {}]
  %s3 = inlined_call_operand.hbm [shape: f32[16,16], index: 3, kind: input, shape index: {}]
  %s4 = inlined_call_operand.hbm [shape: f32[16,16], index: 4, kind: input, shape index: {}]
  %s5 = inlined_call_operand.hbm [shape: f32[2,4,16], index: 5, kind: output, shape index: {}]
  %s6 = sld [smem:[#allocation0]]
  $region73: #{tpu_custom_call.1} parent=0
    _
  %s8 = ssub.s32 1, %s6
  %s9 = scalar_select 0, %s8, %s6
  $region1: #{tpu_custom_call.1} parent=0
    #allocation2 [shape = 'u8[4096]{0}', space=vmem, size = 0x1000, scoped, tag = 'input window, operand 0']
    #allocation3 [shape = 's32[2]{0}', space=sflag, size = 0x8, scoped, tag = 'scoped memory for tpu_custom_call.1']
    #allocation4 [shape = 's32[2]{0}', space=sflag, size = 0x8, scoped, tag = 'scoped memory for tpu_custom_call.1']
    #allocation5 [shape = 'u8[2048]{0}', space=vmem, size = 0x800, scoped, tag = 'input window, operand 1, single buffered']
    #allocation6 [shape = 's32[1]{0}', space=sflag, size = 0x4, scoped, tag = 'scoped memory for tpu_custom_call.1']
    #allocation7 [shape = 'u8[2048]{0}', space=vmem, size = 0x800, scoped, tag = 'input window, operand 2, single buffered']
    #allocation8 [shape = 'u8[8192]{0}', space=vmem, size = 0x2000, scoped, tag = 'input window, operand 3, single buffered']
    #allocation9 [shape = 's32[1]{0}', space=sflag, size = 0x4, scoped, tag = 'scoped memory for tpu_custom_call.1']
    #allocation10 [shape = 'u8[8192]{0}', space=vmem, size = 0x2000, scoped, tag = 'input window, operand 4, single buffered']
    #allocation11 [shape = 'u8[4096]{0}', space=vmem, size = 0x1000, scoped, tag = 'output window, operand 0']
    %10 = vsyncpa [#allocation3], 0
    %s11 = scalar_lea.sflag [#allocation3], 1
    %12 = vsyncpa %s11, 0
    %13 = vsyncpa [#allocation6], 0
    %14 = vsyncpa [#allocation9], 0
    %15 = vsyncpa [#allocation4], 0
    %s16 = scalar_lea.sflag [#allocation4], 1
    %17 = vsyncpa %s16, 0
    loop: start=0, step=1, limit=4
    $region2: #{tpu_custom_call.1} parent=1 // loop_pre_header
      _
    $region3: #{tpu_custom_call.1} parent=1 // loop_header
      %s19 = sphi 0, %s23
      %p20 = scmp.ge.s32.totalorder %s19, 4
      %s26 = sphi 0, %s38
      %s27 = sphi 0, %s34
      %s28 = sphi 0, %s26
      %s29 = sphi 0, %s27
      %s30 = sphi 0, %s28
      %s31 = sphi 0, %s29
      %s41 = sphi 0, %s43
      %s44 = sphi 0, %s41
      %s45 = sphi 0, %s44
      %s61 = sphi 0, %s45
      %s65 = sphi 0, %s65
      %s67 = sphi 0, %s65
      %s68 = sphi 0, %s67
      %s82 = sphi 0, %s68
      %s86 = sphi 0, %s86
      %s88 = sphi 0, %s86
      %s89 = sphi 0, %s88
      %s103 = sphi 0, %s89
      %s109 = sphi 0, %s111
      %s112 = sphi 0, %s109
      %s113 = sphi 0, %s112
      %s129 = sphi 0, %s113
      %s135 = sphi 0, %s137
      %s138 = sphi 0, %s135
      %s139 = sphi 0, %s138
      %s155 = sphi 0, %s139
      %s163 = sphi 0, %s165
      %s166 = sphi 0, %s163
      %s167 = sphi 0, %s166
      %s183 = sphi 0, %s167
    $region4: #{tpu_custom_call.1} parent=1 // loop_header_branch
      %22 = sbr.rel (%p20) target = $region8
    $region5: #{tpu_custom_call.1} parent=1 // loop_body
      %s24 = ssub.s32 %s19, 1
      %s25 = ssub.s32 %s19, 2
      %s32 = sadd.s32 1, %s27
      %p33 = scmp.ge.s32.totalorder %s32, 2
      %s34 = scalar_select %p33, 0, %s32
      %s35 = sadd.s32 1, %s26
      %s36 = scalar_select %p33, %s35, %s26
      %p37 = scmp.ge.s32.totalorder %s36, 1
      %s38 = scalar_select %p37, 0, %s36
      %s39 = ssub.s32 %s27, %s34
      %p40 = scmp.eq.s32.totalorder %s39, 0
      %s42 = sadd.s32 %s41, 1
      %s43 = scalar_select %p40, %s41, %s42
      %p46 = pneg %p40
      %p47 = scmp.eq.s32.totalorder %s19, 1
      %p48 = por %p46, %p47
      %p49 = scmp.ne.s32.totalorder %s41, %s44
      %p50 = scmp.eq.s32.totalorder %s19, 0
      %p51 = por %p49, %p50
      %p52 = scmp.ne.s32.totalorder %s41, %s44
      %p53 = scmp.eq.s32.totalorder %s24, 1
      %p54 = por %p52, %p53
      %p55 = scmp.ne.s32.totalorder %s44, %s45
      %p56 = scmp.eq.s32.totalorder %s24, 0
      %p57 = por %p55, %p56
      %p58 = scmp.ne.s32.totalorder %s44, %s45
      %p59 = scmp.eq.s32.totalorder %s25, 1
      %p60 = por %p58, %p59
      %p62 = scmp.ne.s32.totalorder %s45, %s61
      %p63 = scmp.eq.s32.totalorder %s25, 0
      %p64 = por %p62, %p63
      %s66 = sadd.s32 %s65, 1
      %p69 = scmp.eq.s32.totalorder %s19, 1
      %p70 = scmp.ne.s32.totalorder %s65, %s67
      %p71 = scmp.eq.s32.totalorder %s19, 0
      %p72 = por %p70, %p71
      %p73 = scmp.ne.s32.totalorder %s65, %s67
      %p74 = scmp.eq.s32.totalorder %s24, 1
      %p75 = por %p73, %p74
      %p76 = scmp.ne.s32.totalorder %s67, %s68
      %p77 = scmp.eq.s32.totalorder %s24, 0
      %p78 = por %p76, %p77
      %p79 = scmp.ne.s32.totalorder %s67, %s68
      %p80 = scmp.eq.s32.totalorder %s25, 1
      %p81 = por %p79, %p80
      %p83 = scmp.ne.s32.totalorder %s68, %s82
      %p84 = scmp.eq.s32.totalorder %s25, 0
      %p85 = por %p83, %p84
      %s87 = sadd.s32 %s86, 1
      %p90 = scmp.eq.s32.totalorder %s19, 1
      %p91 = scmp.ne.s32.totalorder %s86, %s88
      %p92 = scmp.eq.s32.totalorder %s19, 0
      %p93 = por %p91, %p92
      %p94 = scmp.ne.s32.totalorder %s86, %s88
      %p95 = scmp.eq.s32.totalorder %s24, 1
      %p96 = por %p94, %p95
      %p97 = scmp.ne.s32.totalorder %s88, %s89
      %p98 = scmp.eq.s32.totalorder %s24, 0
      %p99 = por %p97, %p98
      %p100 = scmp.ne.s32.totalorder %s88, %s89
      %p101 = scmp.eq.s32.totalorder %s25, 1
      %p102 = por %p100, %p101
      %p104 = scmp.ne.s32.totalorder %s89, %s103
      %p105 = scmp.eq.s32.totalorder %s25, 0
      %p106 = por %p104, %p105
      %s107 = ssub.s32 %s26, %s38
      %p108 = scmp.eq.s32.totalorder %s107, 0
      %s110 = sadd.s32 %s109, 1
      %s111 = scalar_select %p108, %s109, %s110
      %p114 = pneg %p108
      %p115 = scmp.eq.s32.totalorder %s19, 1
      %p116 = por %p114, %p115
      %p117 = scmp.ne.s32.totalorder %s109, %s112
      %p118 = scmp.eq.s32.totalorder %s19, 0
      %p119 = por %p117, %p118
      %p120 = scmp.ne.s32.totalorder %s109, %s112
      %p121 = scmp.eq.s32.totalorder %s24, 1
      %p122 = por %p120, %p121
      %p123 = scmp.ne.s32.totalorder %s112, %s113
      %p124 = scmp.eq.s32.totalorder %s24, 0
      %p125 = por %p123, %p124
      %p126 = scmp.ne.s32.totalorder %s112, %s113
      %p127 = scmp.eq.s32.totalorder %s25, 1
      %p128 = por %p126, %p127
      %p130 = scmp.ne.s32.totalorder %s113, %s129
      %p131 = scmp.eq.s32.totalorder %s25, 0
      %p132 = por %p130, %p131
      %s133 = ssub.s32 %s26, %s38
      %p134 = scmp.eq.s32.totalorder %s133, 0
      %s136 = sadd.s32 %s135, 1
      %s137 = scalar_select %p134, %s135, %s136
      %p140 = pneg %p134
      %p141 = scmp.eq.s32.totalorder %s19, 1
      %p142 = por %p140, %p141
      %p143 = scmp.ne.s32.totalorder %s135, %s138
      %p144 = scmp.eq.s32.totalorder %s19, 0
      %p145 = por %p143, %p144
      %p146 = scmp.ne.s32.totalorder %s135, %s138
      %p147 = scmp.eq.s32.totalorder %s24, 1
      %p148 = por %p146, %p147
      %p149 = scmp.ne.s32.totalorder %s138, %s139
      %p150 = scmp.eq.s32.totalorder %s24, 0
      %p151 = por %p149, %p150
      %p152 = scmp.ne.s32.totalorder %s138, %s139
      %p153 = scmp.eq.s32.totalorder %s25, 1
      %p154 = por %p152, %p153
      %p156 = scmp.ne.s32.totalorder %s139, %s155
      %p157 = scmp.eq.s32.totalorder %s25, 0
      %p158 = por %p156, %p157
      %s159 = ssub.s32 %s27, %s34
      %s160 = ssub.s32 %s26, %s38
      %s161 = sor.u32 %s159, %s160
      %p162 = scmp.eq.s32.totalorder %s161, 0
      %s164 = sadd.s32 %s163, 1
      %s165 = scalar_select %p162, %s163, %s164
      %p168 = pneg %p162
      %p169 = scmp.eq.s32.totalorder %s19, 1
      %p170 = por %p168, %p169
      %p171 = scmp.ne.s32.totalorder %s163, %s166
      %p172 = scmp.eq.s32.totalorder %s19, 0
      %p173 = por %p171, %p172
      %p174 = scmp.ne.s32.totalorder %s163, %s166
      %p175 = scmp.eq.s32.totalorder %s24, 1
      %p176 = por %p174, %p175
      %p177 = scmp.ne.s32.totalorder %s166, %s167
      %p178 = scmp.eq.s32.totalorder %s24, 0
      %p179 = por %p177, %p178
      %p180 = scmp.ne.s32.totalorder %s166, %s167
      %p181 = scmp.eq.s32.totalorder %s25, 1
      %p182 = por %p180, %p181
      %p184 = scmp.ne.s32.totalorder %s167, %s183
      %p185 = scmp.eq.s32.totalorder %s25, 0
      %p186 = por %p184, %p185
      %p187 = scmp.le.s32.totalorder 1, %s19
      %p188 = scmp.lt.s32.totalorder %s19, 3
      %p189 = pnand %p187, %p188
      %p190 = pneg %p189
      // Predicated region
      $region9: #{tpu_custom_call.1} parent=5 // pred_check
        _
      $region10: #{tpu_custom_call.1} parent=5 // pred_check_branch
        %192 = sbr.rel (%p189) target = $region12
      $region11: #{tpu_custom_call.1} parent=5 // pred_region
        %s193 = ssub.s32 %s19, 1
        // Predicated region
        $region13: #{tpu_custom_call.1} parent=11 // pred_check
          %p194 = pneg %p78
        $region14: #{tpu_custom_call.1} parent=11 // pred_check_branch
          %196 = sbr.rel (%p194) target = $region16
        $region15: #{tpu_custom_call.1} parent=11 // pred_region
          %198 = vsyncadd [#allocation6], 0
          %s200 = sshll.u32 %s1, 4
          %s201 = int_to_ptr.hbm [resolvable:$true] %s200
          %s202 = sshll.u32 [#allocation5], 4
          %s203 = int_to_ptr.vmem [resolvable:$true] %s202
          %205 = dma.hbm_to_vmem [thread:$0]  %s201, 64, %s203, [#allocation6]
        $region16: #{tpu_custom_call.1} parent=11 // pred_fallthru
          _
        // Predicated region
        $region17: #{tpu_custom_call.1} parent=11 // pred_check
          %p206 = pneg %p99
        $region18: #{tpu_custom_call.1} parent=11 // pred_check_branch
          %208 = sbr.rel (%p206) target = $region20
        $region19: #{tpu_custom_call.1} parent=11 // pred_region
          %210 = vsyncadd [#allocation6], 0
          %s212 = sshll.u32 %s2, 4
          %s213 = int_to_ptr.hbm [resolvable:$true] %s212
          %s214 = sshll.u32 [#allocation7], 4
          %s215 = int_to_ptr.vmem [resolvable:$true] %s214
          %217 = dma.hbm_to_vmem [thread:$0]  %s213, 64, %s215, [#allocation6]
        $region20: #{tpu_custom_call.1} parent=11 // pred_fallthru
          _
        // Predicated region
        $region21: #{tpu_custom_call.1} parent=11 // pred_check
          %p218 = pneg %p125
        $region22: #{tpu_custom_call.1} parent=11 // pred_check_branch
          %220 = sbr.rel (%p218) target = $region24
        $region23: #{tpu_custom_call.1} parent=11 // pred_region
          %222 = vsyncadd [#allocation9], 0
          %s223 = smul.addr %s28, 8
          %s224 = scalar_lea.hbm %s3, %s223
          %s225 = sshll.u32 %s224, 4
          %s226 = int_to_ptr.hbm [resolvable:$true] %s225
          %s227 = sshll.u32 [#allocation8], 4
          %s228 = int_to_ptr.vmem [resolvable:$true] %s227
          %233 = dma.hbm_to_vmem [thread:$0]  %s226, 256, %s228, [#allocation9], 128, 128, 8
        $region24: #{tpu_custom_call.1} parent=11 // pred_fallthru
          _
        // Predicated region
        $region25: #{tpu_custom_call.1} parent=11 // pred_check
          %p234 = pneg %p151
        $region26: #{tpu_custom_call.1} parent=11 // pred_check_branch
          %236 = sbr.rel (%p234) target = $region28
        $region27: #{tpu_custom_call.1} parent=11 // pred_region
          %238 = vsyncadd [#allocation9], 0
          %s239 = smul.addr %s28, 8
          %s240 = scalar_lea.hbm %s4, %s239
          %s241 = sshll.u32 %s240, 4
          %s242 = int_to_ptr.hbm [resolvable:$true] %s241
          %s243 = sshll.u32 [#allocation10], 4
          %s244 = int_to_ptr.vmem [resolvable:$true] %s243
          %249 = dma.hbm_to_vmem [thread:$0]  %s242, 256, %s244, [#allocation9], 128, 128, 8
        $region28: #{tpu_custom_call.1} parent=11 // pred_fallthru
          _
      $region12: #{tpu_custom_call.1} parent=5 // pred_fallthru
        _
      %p250 = scmp.lt.s32.totalorder %s19, 2
      // Predicated region
      $region29: #{tpu_custom_call.1} parent=5 // pred_check
        %p251 = pneg %p250
      $region30: #{tpu_custom_call.1} parent=5 // pred_check_branch
        %253 = sbr.rel (%p251) target = $region32
      $region31: #{tpu_custom_call.1} parent=5 // pred_region
        // Predicated region
        $region33: #{tpu_custom_call.1} parent=31 // pred_check
          %p254 = pneg %p51
        $region34: #{tpu_custom_call.1} parent=31 // pred_check_branch
          %256 = sbr.rel (%p254) target = $region36
        $region35: #{tpu_custom_call.1} parent=31 // pred_region
          %s257 = sand.u32 %s41, 1
          %s258 = scalar_lea.sflag [#allocation3], %s257
          %s259 = sand.u32 %s41, 1
          %s260 = smul.addr %s259, 4
          %s261 = scalar_lea.vmem [#allocation2], %s260
          %263 = vsyncadd %s258, 0
          %s264 = smul.addr %s27, 4
          %s265 = scalar_lea.hbm %s0, %s264
          %s267 = sshll.u32 %s265, 4
          %s268 = int_to_ptr.hbm [resolvable:$true] %s267
          %s269 = sshll.u32 %s261, 4
          %s270 = int_to_ptr.vmem [resolvable:$true] %s269
          %272 = dma.hbm_to_vmem [thread:$0]  %s268, 64, %s270, %s258
        $region36: #{tpu_custom_call.1} parent=31 // pred_fallthru
          _
      $region32: #{tpu_custom_call.1} parent=5 // pred_fallthru
        _
      %p273 = scmp.le.s32.totalorder 1, %s19
      %p274 = scmp.lt.s32.totalorder %s19, 3
      %p275 = pnand %p273, %p274
      %p276 = pneg %p275
      // Predicated region
      $region37: #{tpu_custom_call.1} parent=5 // pred_check
        _
      $region38: #{tpu_custom_call.1} parent=5 // pred_check_branch
        %278 = sbr.rel (%p275) target = $region40
      $region39: #{tpu_custom_call.1} parent=5 // pred_region
        %s279 = ssub.s32 %s19, 1
        %s280 = sand.u32 %s44, 1
        %s281 = scalar_lea.sflag [#allocation3], %s280
        %s282 = sand.u32 %s44, 1
        %s283 = smul.addr %s282, 4
        %s284 = scalar_lea.vmem [#allocation2], %s283
        // Predicated region
        $region41: #{tpu_custom_call.1} parent=39 // pred_check
          %p285 = pneg %p57
        $region42: #{tpu_custom_call.1} parent=39 // pred_check_branch
          %287 = sbr.rel (%p285) target = $region44
        $region43: #{tpu_custom_call.1} parent=39 // pred_region
          %289 = dma.done %s281, 64
        $region44: #{tpu_custom_call.1} parent=39 // pred_fallthru
          _
        // Predicated region
        $region45: #{tpu_custom_call.1} parent=39 // pred_check
          %p290 = pneg %p78
        $region46: #{tpu_custom_call.1} parent=39 // pred_check_branch
          %292 = sbr.rel (%p290) target = $region48
        $region47: #{tpu_custom_call.1} parent=39 // pred_region
          %294 = dma.done [#allocation6], 64
        $region48: #{tpu_custom_call.1} parent=39 // pred_fallthru
          _
        // Predicated region
        $region49: #{tpu_custom_call.1} parent=39 // pred_check
          %p295 = pneg %p99
        $region50: #{tpu_custom_call.1} parent=39 // pred_check_branch
          %297 = sbr.rel (%p295) target = $region52
        $region51: #{tpu_custom_call.1} parent=39 // pred_region
          %299 = dma.done [#allocation6], 64
        $region52: #{tpu_custom_call.1} parent=39 // pred_fallthru
          _
        // Predicated region
        $region53: #{tpu_custom_call.1} parent=39 // pred_check
          %p300 = pneg %p125
        $region54: #{tpu_custom_call.1} parent=39 // pred_check_branch
          %302 = sbr.rel (%p300) target = $region56
        $region55: #{tpu_custom_call.1} parent=39 // pred_region
          %304 = dma.done [#allocation9], 256
        $region56: #{tpu_custom_call.1} parent=39 // pred_fallthru
          _
        // Predicated region
        $region57: #{tpu_custom_call.1} parent=39 // pred_check
          %p305 = pneg %p151
        $region58: #{tpu_custom_call.1} parent=39 // pred_check_branch
          %307 = sbr.rel (%p305) target = $region60
        $region59: #{tpu_custom_call.1} parent=39 // pred_region
          %309 = dma.done [#allocation9], 256
        $region60: #{tpu_custom_call.1} parent=39 // pred_fallthru
          _
        %s310 = sand.u32 %s44, 1
        %s311 = scalar_lea.sflag [#allocation3], %s310
        %s312 = sand.u32 %s44, 1
        %s313 = smul.addr %s312, 4
        %s314 = scalar_lea.vmem [#allocation2], %s313
        %p315 = pneg %p57
        %p316 = pneg %p54
        %p317 = pneg %p78
        %p318 = pneg %p75
        %p319 = pneg %p99
        %p320 = pneg %p96
        %p321 = pneg %p125
        %p322 = pneg %p122
        %p323 = pneg %p151
        %p324 = pneg %p148
        %p325 = pneg %p179
        %p326 = pneg %p176
        %s327 = sand.u32 %s166, 1
        %s328 = scalar_lea.sflag [#allocation4], %s327
        %s329 = sand.u32 %s166, 1
        %s330 = smul.addr %s329, 4
        %s331 = scalar_lea.vmem [#allocation11], %s330
        %v332 = vld [vmem:[%s284] sm:$0xf]
        %v333 = vld [vmem:[#allocation8] sm:$0xff]
        %v334 = vld [vmem:[#allocation8 + $0x8] sm:$0xff]
        %vm335 = vcmask 130048
        %v337 = vsel %vm335, %v332, 0
        %339 = vmatpush.msra.mxu0 0.0
        %340 = vmatpush.msra.mxu0 0.0
        %341 = vmatpush.msra.mxu0 0.0
        %342 = vmatpush.msra.mxu0 0.0
        %343 = vmatpush.msra.mxu0 0.0
        %344 = vmatpush.msra.mxu0 0.0
        %345 = vmatpush.msra.mxu0 0.0
        %346 = vmatpush.msra.mxu0 0.0
        %347 = vmatpush.msra.mxu0 0.0
        %348 = vmatpush.msra.mxu0 0.0
        %349 = vmatpush.msra.mxu0 0.0
        %350 = vmatpush.msra.mxu0 0.0
        %351 = vmatpush.msra.mxu0 0.0
        %352 = vmatpush.msra.mxu0 0.0
        %353 = vmatpush.msra.mxu0 %v334
        %354 = vmatpush.msra.mxu0 %v333
        %355 = vmatmul.f32.gmra.mxu0 %v337
        %v356 = vpop.f32.mrf.mxu0
        %v357 = vadd.f32 0.0, %v356
        %358 = vdwg.mxu0
        %v359 = vld [vmem:[#allocation10] sm:$0xff]
        %v360 = vld [vmem:[#allocation10 + $0x8] sm:$0xff]
        %361 = vmatpush.msra.mxu0 0.0
        %362 = vmatpush.msra.mxu0 0.0
        %363 = vmatpush.msra.mxu0 0.0
        %364 = vmatpush.msra.mxu0 0.0
        %365 = vmatpush.msra.mxu0 0.0
        %366 = vmatpush.msra.mxu0 0.0
        %367 = vmatpush.msra.mxu0 0.0
        %368 = vmatpush.msra.mxu0 0.0
        %369 = vmatpush.msra.mxu0 0.0
        %370 = vmatpush.msra.mxu0 0.0
        %371 = vmatpush.msra.mxu0 0.0
        %372 = vmatpush.msra.mxu0 0.0
        %373 = vmatpush.msra.mxu0 0.0
        %374 = vmatpush.msra.mxu0 0.0
        %375 = vmatpush.msra.mxu0 %v360
        %376 = vmatpush.msra.mxu0 %v359
        %377 = vmatmul.f32.gmra.mxu0 %v337
        %v378 = vpop.f32.mrf.mxu0
        %v379 = vadd.f32 0.0, %v378
        %380 = vdwg.mxu0
        %v381 = vld [vmem:[#allocation5] sm:$0xf]
        %vm382 = vcmask 31744
        %v384 = vsel %vm382, %v381, 0
        %vm386 = vcmask 1043456
        %v388 = vsel %vm386, %v357, 0
        %390 = vmatpush.msra.mxu0 0.0
        %391 = vmatpush.msra.mxu0 0.0
        %392 = vmatpush.msra.mxu0 0.0
        %393 = vmatpush.msra.mxu0 0.0
        %394 = vmatpush.msra.mxu0 0.0
        %395 = vmatpush.msra.mxu0 0.0
        %396 = vmatpush.msra.mxu0 0.0
        %397 = vmatpush.msra.mxu0 0.0
        %398 = vmatpush.msra.mxu0 0.0
        %399 = vmatpush.msra.mxu0 0.0
        %400 = vmatpush.msra.mxu0 0.0
        %401 = vmatpush.msra.mxu0 0.0
        %402 = vmatpush.msra.mxu0 0.0
        %403 = vmatpush.msra.mxu0 0.0
        %404 = vmatpush.msra.mxu0 0.0
        %405 = vmatpush.msra.mxu0 %v388
        %406 = vmatmul.f32.gmra.mxu0 %v384
        %v407 = vpop.f32.mrf.mxu0
        %v408 = vadd.f32 0.0, %v407
        %409 = vdwg.mxu0
        %vm410 = vcmask 125952
        %411 = vst.msk [vmem:[%s331] sm:$0xf] %vm410, %v408
        %v412 = vld [vmem:[%s331] sm:$0xf]
        %v413 = vld [vmem:[#allocation7] sm:$0xf]
        %v415 = vsel %vm382, %v413, 0
        %v418 = vsel %vm386, %v379, 0
        %420 = vmatpush.msra.mxu0 0.0
        %421 = vmatpush.msra.mxu0 0.0
        %422 = vmatpush.msra.mxu0 0.0
        %423 = vmatpush.msra.mxu0 0.0
        %424 = vmatpush.msra.mxu0 0.0
        %425 = vmatpush.msra.mxu0 0.0
        %426 = vmatpush.msra.mxu0 0.0
        %427 = vmatpush.msra.mxu0 0.0
        %428 = vmatpush.msra.mxu0 0.0
        %429 = vmatpush.msra.mxu0 0.0
        %430 = vmatpush.msra.mxu0 0.0
        %431 = vmatpush.msra.mxu0 0.0
        %432 = vmatpush.msra.mxu0 0.0
        %433 = vmatpush.msra.mxu0 0.0
        %434 = vmatpush.msra.mxu0 0.0
        %435 = vmatpush.msra.mxu0 %v418
        %436 = vmatmul.f32.gmra.mxu0 %v415
        %v437 = vpop.f32.mrf.mxu0
        %v438 = vadd.f32 0.0, %v437
        %439 = vdwg.mxu0
        %v440 = vadd.f32 %v412, %v438
        %441 = vst.msk [vmem:[%s331] sm:$0xf] %vm410, %v440
        %s442 = sand.u32 %s166, 1
        %s443 = scalar_lea.sflag [#allocation4], %s442
        %s444 = sand.u32 %s166, 1
        %s445 = smul.addr %s444, 4
        %s446 = scalar_lea.vmem [#allocation11], %s445
        // Predicated region
        $region61: #{tpu_custom_call.1} parent=39 // pred_check
          %p447 = pneg %p176
        $region62: #{tpu_custom_call.1} parent=39 // pred_check_branch
          %449 = sbr.rel (%p447) target = $region64
        $region63: #{tpu_custom_call.1} parent=39 // pred_region
          %451 = vsyncadd %s443, 0
          %s452 = sadd.s32 %s28, %s29
          %s453 = smul.addr %s452, 4
          %s454 = scalar_lea.hbm %s5, %s453
          %s456 = sshll.u32 %s446, 4
          %s457 = int_to_ptr.vmem [resolvable:$true] %s456
          %s458 = sshll.u32 %s454, 4
          %s459 = int_to_ptr.hbm [resolvable:$true] %s458
          %461 = dma.vmem_to_hbm [thread:$0]  %s457, 64, %s459, %s443
        $region64: #{tpu_custom_call.1} parent=39 // pred_fallthru
          _
      $region40: #{tpu_custom_call.1} parent=5 // pred_fallthru
        _
      %p462 = scmp.le.s32.totalorder 2, %s19
      // Predicated region
      $region65: #{tpu_custom_call.1} parent=5 // pred_check
        %p463 = pneg %p462
      $region66: #{tpu_custom_call.1} parent=5 // pred_check_branch
        %465 = sbr.rel (%p463) target = $region68
      $region67: #{tpu_custom_call.1} parent=5 // pred_region
        %s466 = ssub.s32 %s19, 2
        // Predicated region
        $region69: #{tpu_custom_call.1} parent=67 // pred_check
          %p467 = pneg %p182
        $region70: #{tpu_custom_call.1} parent=67 // pred_check_branch
          %469 = sbr.rel (%p467) target = $region72
        $region71: #{tpu_custom_call.1} parent=67 // pred_region
          %s470 = sand.u32 %s167, 1
          %s471 = scalar_lea.sflag [#allocation4], %s470
          %s472 = sand.u32 %s167, 1
          %s473 = smul.addr %s472, 4
          %s474 = scalar_lea.vmem [#allocation11], %s473
          %476 = dma.done %s471, 64
        $region72: #{tpu_custom_call.1} parent=67 // pred_fallthru
          _
      $region68: #{tpu_custom_call.1} parent=5 // pred_fallthru
        _
    $region6: #{tpu_custom_call.1} parent=1 // loop_footer
      %s23 = sadd.s32 1, %s19
    $region7: #{tpu_custom_call.1} parent=1 // loop_footer_branch
      %18 = sbr.rel target = $region3
    $region8: #{tpu_custom_call.1} parent=1 // loop_exit
      _
    %477 = vsyncpa [#allocation3], 1
    %s478 = scalar_lea.sflag [#allocation3], 1
    %479 = vsyncpa %s478, 1
    %480 = vsyncpa [#allocation6], 1
    %481 = vsyncpa [#allocation9], 1
    %482 = vsyncpa [#allocation4], 1
    %s483 = scalar_lea.sflag [#allocation4], 1
    %484 = vsyncpa %s483, 1

</llo_original>
